<compile_context>
chip_gen: v7x
topology: tpu7x:2x2x1
jax: 0.10.0
libtpu: 0.0.40
codegen_flags: <defaults>
</compile_context>

<pallas_src>
import numpy as np

import jax
import jax.numpy as jnp
from jax.experimental import pallas as pl
from jax.experimental.pallas import tpu as pltpu


def _round_up(x: int, m: int) -> int:
    return ((x + m - 1) // m) * m


def _sublane(dtype) -> int:
    # 8 rows per vreg tile for 4-byte dtypes, 16 for 2-byte (bf16 packing).
    return max(8, 32 // np.dtype(dtype).itemsize)


_TARGET_BLOCK_BYTES = 3 << 20   # per (largest) buffer; with double-buffered in+out this
                                # stays ~12-16 MiB, safe on v5e/v6e/v7x with the explicit
                                # 48 MiB scoped-VMEM limit below.
_VMEM_LIMIT_BYTES = 48 << 20


def _choose_block_rows(rows: int, row_bytes: int, sublane: int):
    """Even block split: <= ~_TARGET_BLOCK_BYTES per buffer, >= 2 grid steps when the
    slab is big enough (v7x has 2 TensorCores), partial last block instead of rounding
    `rows` up to a whole block (minimal wasted DMA/vst traffic)."""
    if rows <= sublane:
        return rows, 1                                  # single full-extent block
    max_rows = max(sublane, (_TARGET_BLOCK_BYTES // row_bytes) // sublane * sublane)
    nb = pl.cdiv(rows, max_rows)
    if rows >= 2 * sublane:
        nb = max(nb, 2)                                 # let both v7x TCs take a step
    block_r = _round_up(pl.cdiv(rows, nb), sublane)
    block_r = max(sublane, min(block_r, (rows // sublane) * sublane))
    return block_r, pl.cdiv(rows, block_r)


# ----------------------------------------------------------------------------- kernels

def _lower_cholesky_kernel(code_ref, x_ref, o_ref):
    # code_ref: (1, C) f32 per-lane entry class: 2.0 = diagonal, 1.0 = strict lower,
    #           0.0 = strict upper / padding.  Broadcasts over the row axis.
    # x_ref / o_ref: (block_r, C) lane-dense slab of flattened (n, i, j) entries.
    x = x_ref[...]
    code = code_ref[...]
    # where() keeps the output finite even if exp overflows on masked lanes.
    o_ref[...] = jnp.where(code == 2.0, jnp.exp(x),
                           jnp.where(code == 1.0, x, 0.0)).astype(o_ref.dtype)


def _diag_softplus_embed_kernel(p_ref, x_ref, o_ref):
    # Fused softplus + diag_embed:
    #   x_ref: (block_r, d*128)  flattened (n, i) entries
    #   p_ref: (d*128, d*d*128)  constant 0/1 bf16 placement matrix
    #   o_ref: (block_r, d*d*128) flattened (n, i, j) diag-embedded output
    # The lane scatter is done on the MXU; a 3-way bf16 split transports the f32
    # softplus values exactly (each chunk is bf16-representable, P is 0/1, products
    # and the f32 accumulation are exact).
    sp = jax.nn.softplus(x_ref[...].astype(jnp.float32))
    p = p_ref[...]
    hi = sp.astype(jnp.bfloat16)
    r1 = sp - hi.astype(jnp.float32)
    mid = r1.astype(jnp.bfloat16)
    lo = (r1 - mid.astype(jnp.float32)).astype(jnp.bfloat16)
    out = (jnp.dot(hi, p, preferred_element_type=jnp.float32)
           + jnp.dot(mid, p, preferred_element_type=jnp.float32)
           + jnp.dot(lo, p, preferred_element_type=jnp.float32))
    o_ref[...] = out.astype(o_ref.dtype)


# ----------------------------------------------------------------------------- wrappers

@jax.jit
def lower_cholesky_transform(gamma_param: jax.Array) -> jax.Array:
    """(S, M, d, d) unconstrained -> tril(x,-1) + diag_embed(exp(diag(x)))."""
    S, M, d, _ = gamma_param.shape
    dd = d * d
    T = S * M * dd
    C = dd * 128                                   # lane-dense, multiple of 128 and d*d
    rows = pl.cdiv(T, C)
    itemsize = np.dtype(gamma_param.dtype).itemsize
    sub = _sublane(gamma_param.dtype)
    block_r, grid = _choose_block_rows(rows, C * itemsize, sub)

    flat = gamma_param.reshape(-1)
    needs_pad = (rows * C != T)
    if needs_pad:
        flat = jnp.pad(flat, (0, rows * C - T))
    x = flat.reshape(rows, C)

    # Per-lane entry code, computed once at trace time (tiny, resident in VMEM).
    q = np.arange(C) % dd
    i, j = q // d, q % d
    code = jnp.asarray(
        np.where(i == j, 2.0, np.where(i > j, 1.0, 0.0)).astype(np.float32)[None, :])

    out = pl.pallas_call(
        _lower_cholesky_kernel,
        out_shape=jax.ShapeDtypeStruct((rows, C), gamma_param.dtype),
        grid_spec=pltpu.PrefetchScalarGridSpec(
            num_scalar_prefetch=0,
            grid=(grid,),
            in_specs=[
                pl.BlockSpec((1, C), lambda r: (0, 0)),          # code: resident
                pl.BlockSpec((block_r, C), lambda r: (r, 0)),    # data
            ],
            out_specs=pl.BlockSpec((block_r, C), lambda r: (r, 0)),
        ),
        compiler_params=pltpu.CompilerParams(
            dimension_semantics=("parallel",),
            vmem_limit_bytes=_VMEM_LIMIT_BYTES,
            allow_input_fusion=[False, True],      # let the pad/reshape fuse as input
        ),
    )(code, x)

    if needs_pad:
        return out.reshape(-1)[:T].reshape(S, M, d, d)
    return out.reshape(S, M, d, d)


@jax.jit
def diag_softplus_transform(gamma_param: jax.Array) -> jax.Array:
    """(S, M, d) unconstrained -> diag_embed(softplus(x)) with shape (S, M, d, d)."""
    S, M, d = gamma_param.shape
    dd = d * d
    N = S * M
    T_in, T_out = N * d, N * dd
    C_in, C_out = d * 128, dd * 128                # output row r covers the same n's as
    sub = _sublane(gamma_param.dtype)              # input row r (C_out/dd == C_in/d == 128)
    rows = max(pl.cdiv(T_in, C_in), sub)           # keep matmul LHS sublane dim >= 8
    block_r, grid = _choose_block_rows(rows, C_out * 4, sub)

    flat = gamma_param.reshape(-1)
    if rows * C_in != T_in:
        flat = jnp.pad(flat, (0, rows * C_in - T_in))
    x = flat.reshape(rows, C_in)

    # P[l, c] = 1 iff output lane c is a diagonal entry (i == j) sourced from input
    # lane l = n*d + i, with n = c // dd, i = (c % dd) // d, j = c % d.
    c = np.arange(C_out)
    n_, i_, j_ = c // dd, (c % dd) // d, c % d
    P_np = np.zeros((C_in, C_out), dtype=np.float32)
    diag = (i_ == j_)
    P_np[(n_ * d + i_)[diag], c[diag]] = 1.0
    P = jnp.asarray(P_np, dtype=jnp.bfloat16)

    out = pl.pallas_call(
        _diag_softplus_embed_kernel,
        out_shape=jax.ShapeDtypeStruct((rows, C_out), gamma_param.dtype),
        grid_spec=pltpu.PrefetchScalarGridSpec(
            num_scalar_prefetch=0,
            grid=(grid,),
            in_specs=[
                pl.BlockSpec((C_in, C_out), lambda r: (0, 0)),   # P: resident
                pl.BlockSpec((block_r, C_in), lambda r: (r, 0)),
            ],
            out_specs=pl.BlockSpec((block_r, C_out), lambda r: (r, 0)),
        ),
        compiler_params=pltpu.CompilerParams(
            dimension_semantics=("parallel",),
            vmem_limit_bytes=_VMEM_LIMIT_BYTES,
            allow_input_fusion=[False, True],
        ),
    )(P, x)

    if rows * C_out != T_out:
        return out.reshape(-1)[:T_out].reshape(S, M, d, d)
    return out.reshape(S, M, d, d)


class FPallas:
    """JAX/Pallas port of mgplvm `_F` with manif = Euclid(d)."""

    def __init__(self, n_samples: int, m: int, d: int, sigma: float = 1.5,
                 diagonal: bool = False, key=jax.random.PRNGKey(0)):
        self.d = d
        self.diagonal = diagonal
        # gmu init ('random' initialization for Euclid): small gaussian, deterministic.
        self.gmu = 0.1 * jax.random.normal(key, (n_samples, m, d), dtype=jnp.float32)
        # gamma init: gamma = ones * sigma, then inverse of the constraining transform.
        gvals = jnp.full((n_samples, m, d), sigma, dtype=jnp.float32)
        if diagonal:
            self.gamma = jnp.log(jnp.expm1(gvals))                        # inv_softplus
        else:
            # LowerCholeskyTransform.inv(diag_embed(sigma)) = diag_embed(log(sigma))
            self.gamma = jnp.log(gvals)[..., :, None] * jnp.eye(d, dtype=jnp.float32)

    def forward(self, batch_idxs=None, sample_idxs=None):
        gmu = self.gmu                     # manif.parameterise == identity for Euclid
        if self.diagonal:
            gamma = diag_softplus_transform(self.gamma)
        else:
            gamma = lower_cholesky_transform(self.gamma)
        if sample_idxs is not None:
            gmu = gmu[sample_idxs]
            gamma = gamma[sample_idxs]
        if batch_idxs is None:
            return gmu, gamma
        return gmu[:, batch_idxs, :], gamma[:, batch_idxs]


# ----------------------------------------------------------------------------- main

if __name__ == "__main__":
    def _ref_lower_cholesky(x):
        dvals = jnp.diagonal(x, axis1=-2, axis2=-1)
        eye = jnp.eye(x.shape[-1], dtype=x.dtype)
        return jnp.tril(x, -1) + jnp.exp(dvals)[..., :, None] * eye

    # Small module-consistent shapes (single-block, padded path).
    n_samples, m, d = 2, 16, 3
    mod = FPallas(n_samples, m, d, sigma=1.5, diagonal=False, key=jax.random.PRNGKey(0))
    gmu, gamma = jax.block_until_ready(mod.forward())
    assert gmu.shape == (n_samples, m, d)
    assert gamma.shape == (n_samples, m, d, d)
    assert jnp.allclose(gamma, _ref_lower_cholesky(mod.gamma), atol=1e-6), "gamma mismatch"
    assert jnp.allclose(gmu, mod.gmu), "gmu mismatch"

    # Medium: S*M % 128 == 0 -> no pad/slice, even 2-block split.
    key = jax.random.PRNGKey(1)
    S2, M2 = 2, 8192
    big = FPallas(S2, M2, d, sigma=1.5, diagonal=False, key=key)
    big.gamma = 0.3 * jax.random.normal(key, (S2, M2, d, d), dtype=jnp.float32)
    _, gamma_big = jax.block_until_ready(big.forward())
    assert jnp.allclose(gamma_big, _ref_lower_cholesky(big.gamma), atol=1e-6), "big gamma mismatch"

    # Pad + partial-last-block path.
    S3, M3 = 2, 2500
    odd = FPallas(S3, M3, d, sigma=1.5, diagonal=False, key=jax.random.PRNGKey(2))
    odd.gamma = 0.5 * jax.random.normal(jax.random.PRNGKey(3), (S3, M3, d, d), dtype=jnp.float32)
    _, gamma_odd = jax.block_until_ready(odd.forward())
    assert jnp.allclose(gamma_odd, _ref_lower_cholesky(odd.gamma), atol=1e-6), "odd gamma mismatch"

    # Diagonal branch (fused softplus + diag_embed), small and multi-block.
    mod_diag = FPallas(n_samples, m, d, sigma=1.5, diagonal=True, key=jax.random.PRNGKey(0))
    _, gamma_d = jax.block_until_ready(mod_diag.forward())
    ref_d = jax.nn.softplus(mod_diag.gamma)[..., :, None] * jnp.eye(d, dtype=jnp.float32)
    assert jnp.allclose(gamma_d, ref_d, atol=1e-6), "diagonal gamma mismatch"

    big_diag = FPallas(S2, M2, d, sigma=1.5, diagonal=True, key=jax.random.PRNGKey(4))
    big_diag.gamma = 0.3 * jax.random.normal(jax.random.PRNGKey(5), (S2, M2, d), dtype=jnp.float32)
    _, gamma_d2 = jax.block_until_ready(big_diag.forward())
    ref_d2 = jax.nn.softplus(big_diag.gamma)[..., :, None] * jnp.eye(d, dtype=jnp.float32)
    assert jnp.allclose(gamma_d2, ref_d2, atol=1e-6), "big diagonal gamma mismatch"

    print("KERNEL_OK")
</pallas_src>

<mosaic_0001>
module attributes {stable_mosaic.version = 11 : i64} {
  func.func @_lower_cholesky_kernel(%arg0: i32, %arg1: memref<1x1152xf32, #tpu.memory_space<vmem>>, %arg2: memref<1x1152xf32, #tpu.memory_space<vmem>>, %arg3: memref<1x1152xf32, #tpu.memory_space<vmem>>) attributes {dimension_semantics = [#tpu.dimension_semantics<parallel>], iteration_bounds = array<i64: 1>, scalar_prefetch = 0 : i64, scratch_operands = 0 : i64, tpu.core_type = #tpu.core_type<tc>, window_params = [{pipeline_mode = #tpu.pipeline_mode<synchronous>, transform_indices = @transform_0, window_bounds = array<i64: 1, 1152>}, {transform_indices = @transform_1, window_bounds = array<i64: 1, 1152>}, {transform_indices = @transform_2, window_bounds = array<i64: 1, 1152>}]} {
    %c0 = arith.constant 0 : index
    %c0_0 = arith.constant 0 : index
    %0 = vector.load %arg2[%c0, %c0_0] : memref<1x1152xf32, #tpu.memory_space<vmem>>, vector<1x1152xf32>
    %c0_1 = arith.constant 0 : index
    %c0_2 = arith.constant 0 : index
    %1 = vector.load %arg1[%c0_1, %c0_2] : memref<1x1152xf32, #tpu.memory_space<vmem>>, vector<1x1152xf32>
    %cst = arith.constant 2.000000e+00 : f32
    %2 = vector.broadcast %cst : f32 to vector<1x1152xf32>
    %3 = arith.cmpf oeq, %1, %2 : vector<1x1152xf32>
    %4 = math.exp %0 : vector<1x1152xf32>
    %cst_3 = arith.constant 1.000000e+00 : f32
    %5 = vector.broadcast %cst_3 : f32 to vector<1x1152xf32>
    %6 = arith.cmpf oeq, %1, %5 : vector<1x1152xf32>
    %cst_4 = arith.constant 0.000000e+00 : f32
    %7 = vector.broadcast %cst_4 : f32 to vector<1x1152xf32>
    %8 = arith.select %6, %0, %7 : vector<1x1152xi1>, vector<1x1152xf32>
    %9 = arith.select %3, %4, %8 : vector<1x1152xi1>, vector<1x1152xf32>
    %c0_5 = arith.constant 0 : index
    %c0_6 = arith.constant 0 : index
    %10 = vector.load %arg3[%c0_5, %c0_6] : memref<1x1152xf32, #tpu.memory_space<vmem>>, vector<1x1152xf32>
    tpu.vector_store %arg3[%c0_5, %c0_6], %9 {strides = array<i32>} : memref<1x1152xf32, #tpu.memory_space<vmem>>, vector<1x1152xf32>,
    return
  }
  func.func @transform_0(%arg0: i32) -> (i32, i32) {
    %c0_i32 = arith.constant 0 : i32
    %c0_i32_0 = arith.constant 0 : i32
    %c0_i32_1 = arith.constant 0 : i32
    return %c0_i32, %c0_i32_0 : i32, i32
  }
  func.func @transform_1(%arg0: i32) -> (i32, i32) {
    %c0_i32 = arith.constant 0 : i32
    %c0_i32_0 = arith.constant 0 : i32
    return %arg0, %c0_i32 : i32, i32
  }
  func.func @transform_2(%arg0: i32) -> (i32, i32) {
    %c0_i32 = arith.constant 0 : i32
    %c0_i32_0 = arith.constant 0 : i32
    return %arg0, %c0_i32 : i32, i32
  }
}

</mosaic_0001>

<llo_original>
// kernel: lower_cholesky_transform.2
$region0: #{lower_cholesky_transform.2}
  #allocation0 [shape = 'u32[]', space=smem, size = 0x4, offset = 0x4, fixed_abs, tag = 'smem constant byte address 0x4 - core index']
  #allocation1 [shape = 'u32[144,128]{1,0:T(1,128)}', space=vmem, size = 0x12000, scoped, tag = 'internal scratch']
  %s0 = inlined_call_operand.vmem [shape: f32[1,1152], index: 0, kind: input, shape index: {}]
  %s1 = inlined_call_operand.vmem [shape: f32[1152], index: 1, kind: input, shape index: {}]
  %s2 = inlined_call_operand.vmem [shape: f32[1,1152], index: 2, kind: output, shape index: {}]
  %s3 = sld [smem:[#allocation0]]
  $region18: #{lower_cholesky_transform.2} parent=0
    _
  %s5 = ssub.s32 1, %s3
  %s6 = scalar_select 0, %s5, %s3
  $region1: #{lower_cholesky_transform.2} parent=0
    #allocation2 [shape = 'u8[4608]{0}', space=vmem, size = 0x1400, dematerialized = true, scoped, tag = 'FusionAdapter Buffer %fusion.1 = f32[1,1152]{1,0:T(1,128)} fusion(%param_1.1), kind=kLoop, calls=%fused_computation.1.clone, metadata={op_name="jit(lower_cholesky_transform)/reshape" stack_frame_id=10}']
    // Predicated region
    $region2: #{lower_cholesky_transform.2} parent=1 // pred_check
      _
    $region3: #{lower_cholesky_transform.2} parent=1 // pred_check_branch
      %8 = sbr.rel (0) target = $region5
    $region4: #{lower_cholesky_transform.2} parent=1 // pred_region
      _
    $region5: #{lower_cholesky_transform.2} parent=1 // pred_fallthru
      _
    // Predicated region
    $region6: #{lower_cholesky_transform.2} parent=1 // pred_check
      _
    $region7: #{lower_cholesky_transform.2} parent=1 // pred_check_branch
      %10 = sbr.rel (0) target = $region9
    $region8: #{lower_cholesky_transform.2} parent=1 // pred_region
      _
    $region9: #{lower_cholesky_transform.2} parent=1 // pred_fallthru
      _
    %v11 = vld [vmem:[%s1] ss:$0 sm:$0xff]
    %13 = vst [vmem:[#allocation2] sm:$0x1] %v11
    %s14 = scalar_lea.vmem %s1, 1
    %v15 = vld [vmem:[%s14] ss:$0 sm:$0xff]
    %s16 = scalar_lea.vmem [#allocation2], 1
    %18 = vst [vmem:[%s16] sm:$0x1] %v15
    %s19 = scalar_lea.vmem %s1, 2
    %v20 = vld [vmem:[%s19] ss:$0 sm:$0xff]
    %s21 = scalar_lea.vmem [#allocation2], 2
    %23 = vst [vmem:[%s21] sm:$0x1] %v20
    %s24 = scalar_lea.vmem %s1, 3
    %v25 = vld [vmem:[%s24] ss:$0 sm:$0xff]
    %s26 = scalar_lea.vmem [#allocation2], 3
    %28 = vst [vmem:[%s26] sm:$0x1] %v25
    %s29 = scalar_lea.vmem %s1, 4
    %v30 = vld [vmem:[%s29] ss:$0 sm:$0xff]
    %s31 = scalar_lea.vmem [#allocation2], 4
    %33 = vst [vmem:[%s31] sm:$0x1] %v30
    %s34 = scalar_lea.vmem %s1, 5
    %v35 = vld [vmem:[%s34] ss:$0 sm:$0xff]
    %s36 = scalar_lea.vmem [#allocation2], 5
    %38 = vst [vmem:[%s36] sm:$0x1] %v35
    %s39 = scalar_lea.vmem %s1, 6
    %v40 = vld [vmem:[%s39] ss:$0 sm:$0xff]
    %s41 = scalar_lea.vmem [#allocation2], 6
    %43 = vst [vmem:[%s41] sm:$0x1] %v40
    %s44 = scalar_lea.vmem %s1, 7
    %v45 = vld [vmem:[%s44] ss:$0 sm:$0xff]
    %s46 = scalar_lea.vmem [#allocation2], 7
    %48 = vst [vmem:[%s46] sm:$0x1] %v45
    %s49 = scalar_lea.vmem %s1, 8
    %v50 = vld [vmem:[%s49] ss:$0 sm:$0xff]
    %s51 = scalar_lea.vmem [#allocation2], 8
    %53 = vst [vmem:[%s51] sm:$0x1] %v50
    %v54 = vld [vmem:[#allocation2] sm:$0xff]
    %v55 = vld [vmem:[#allocation2 + $0x8] sm:$0x1]
    %v56 = vld [vmem:[%s0] sm:$0xff]
    %v57 = vld [vmem:[%s0 + $0x8] sm:$0x1]
    %vm58 = vcmp.eq.f32.partialorder %v56, 2.0
    %vm59 = vcmp.eq.f32.partialorder %v57, 2.0
    %v60 = vmul.f32 %v54, 1.442695
    %v61 = vpow.pop %v60
    %v62 = vmul.f32 %v55, 1.442695
    %v63 = vpow.pop %v62
    %vm64 = vcmp.eq.f32.partialorder %v56, 1.0
    %vm65 = vcmp.eq.f32.partialorder %v57, 1.0
    %v66 = vsel %vm64, %v54, 0.0
    %v67 = vsel %vm65, %v55, 0.0
    %v68 = vsel %vm58, %v61, %v66
    %v69 = vsel %vm59, %v63, %v67
    %70 = vst [vmem:[%s2] sm:$0xff] %v68
    %v71 = vlaneseq
    %vm72 = vcmp.ge.s32.totalorder %v71, 0
    %vm73 = vcmp.lt.s32.totalorder %v71, 128
    %vm74 = vmand %vm72, %vm73
    %75 = vst.msk [vmem:[%s2 + $0x8] sm:$0x1] %vm74, %v69
    // Predicated region
    $region10: #{lower_cholesky_transform.2} parent=1 // pred_check
      _
    $region11: #{lower_cholesky_transform.2} parent=1 // pred_check_branch
      %77 = sbr.rel (0) target = $region13
    $region12: #{lower_cholesky_transform.2} parent=1 // pred_region
      _
    $region13: #{lower_cholesky_transform.2} parent=1 // pred_fallthru
      _
    // Predicated region
    $region14: #{lower_cholesky_transform.2} parent=1 // pred_check
      _
    $region15: #{lower_cholesky_transform.2} parent=1 // pred_check_branch
      %79 = sbr.rel (0) target = $region17
    $region16: #{lower_cholesky_transform.2} parent=1 // pred_region
      _
    $region17: #{lower_cholesky_transform.2} parent=1 // pred_fallthru
      _

</llo_original>
